<compile_context>
chip_gen: v7x
topology: tpu7x:2x2x1
jax: 0.10.0
libtpu: 0.0.40
codegen_flags: <defaults>
</compile_context>

<pallas_src>
import functools

import jax
import jax.numpy as jnp
from jax import lax
from jax.experimental import pallas as pl
from jax.experimental.pallas import tpu as pltpu

KER = 3  # ker_width


def conv3x3_relu_kernel(x_ref, w_ref, b_ref, o_ref, *, W):
    """Fused 3x3 conv (padding=1) + bias + ReLU on flattened NCHW tiles.

    x_ref: (NB, C, H*W)      flattened images (lane dim = H*W, dense)
    w_ref: (C, 9*C)          weights, column index = (ky*3+kx)*C + ci
    b_ref: (C, 1)            bias column
    o_ref: (NB, C, H*W)      output
    """
    NB, C, HW = x_ref.shape

    # Column (w) position of every lane; used to mask the left/right halo.
    col = lax.broadcasted_iota(jnp.int32, (1, HW), 1) % W
    mask_dx_m1 = col >= 1        # tap reads w-1: invalid at w == 0
    mask_dx_p1 = col <= W - 2    # tap reads w+1: invalid at w == W-1

    wmat = w_ref[...]            # (C, 9C)
    bcol = b_ref[...]            # (C, 1)

    for i in range(NB):          # NB is small & static (<= ceil(N/2))
        x = x_ref[i]             # (C, HW)

        taps = []
        for dy in (-1, 0, 1):
            for dx in (-1, 0, 1):
                off = dy * W + dx            # flat-index shift for this tap
                if off == 0:
                    s = x
                elif off > 0:
                    # s[:, i] = x[:, i + off]; tail (top of next row / image end) -> 0
                    pad = jnp.zeros((C, off), x.dtype)
                    s = jnp.concatenate([x[:, off:], pad], axis=1)
                else:
                    # s[:, i] = x[:, i + off]; head -> 0
                    pad = jnp.zeros((C, -off), x.dtype)
                    s = jnp.concatenate([pad, x[:, :off]], axis=1)
                # zero the columns that would wrap across a row boundary
                if dx == -1:
                    s = jnp.where(mask_dx_m1, s, 0.0)
                elif dx == 1:
                    s = jnp.where(mask_dx_p1, s, 0.0)
                taps.append(s)

        patches = jnp.concatenate(taps, axis=0)              # (9*C, HW)
        # Single MXU matmul: (C, 9C) @ (9C, HW) -> (C, HW), f32 accumulate.
        acc = jnp.dot(wmat, patches, preferred_element_type=jnp.float32)
        acc = acc + bcol
        o_ref[i] = jnp.maximum(acc, 0.0).astype(o_ref.dtype)


def step_layer_forward(x_nchw, w_oihw, bias):
    """StepLayer.forward: relu(conv2d(x, w, b, padding=1)).  NCHW in/out."""
    N, C, H, W = x_nchw.shape
    HW = H * W

    # Free reshapes only — no transposes, no padding, no extra HBM passes.
    x_flat = x_nchw.reshape(N, C, HW)
    # (Cout, Cin, Kh, Kw) -> (Cout, Kh, Kw, Cin) -> (Cout, 9*Cin); column order
    # matches the tap stacking order inside the kernel ((ky*3+kx)*C + ci).
    w_mat = jnp.transpose(w_oihw, (0, 2, 3, 1)).reshape(C, KER * KER * C)
    b_col = bias.reshape(C, 1)

    # <=2 grid steps: big blocks (several images each) when N is large, and a
    # 2-wide "parallel" axis so v7x's two TensorCores both get work.
    G = 2 if (N >= 2 and N % 2 == 0) else 1
    NB = N // G

    itemsize = jnp.dtype(x_nchw.dtype).itemsize
    cost = pl.CostEstimate(
        flops=2 * N * HW * C * C * KER * KER,
        transcendentals=0,
        bytes_accessed=(x_flat.size + w_mat.size + b_col.size + N * C * HW)
        * itemsize,
    )

    out_flat = pl.pallas_call(
        functools.partial(conv3x3_relu_kernel, W=W),
        out_shape=jax.ShapeDtypeStruct((N, C, HW), x_nchw.dtype),
        grid_spec=pltpu.PrefetchScalarGridSpec(
            num_scalar_prefetch=0,
            grid=(G,),
            in_specs=[
                pl.BlockSpec((NB, C, HW), lambda n: (n, 0, 0)),
                pl.BlockSpec((C, KER * KER * C), lambda n: (0, 0)),
                pl.BlockSpec((C, 1), lambda n: (0, 0)),
            ],
            out_specs=pl.BlockSpec((NB, C, HW), lambda n: (n, 0, 0)),
        ),
        compiler_params=pltpu.CompilerParams(
            dimension_semantics=("parallel",)),
        cost_estimate=cost,
    )(x_flat, w_mat, b_col)

    return out_flat.reshape(N, C, H, W)


def _reference_forward(x_nchw, w_oihw, bias):
    out = lax.conv_general_dilated(
        x_nchw, w_oihw,
        window_strides=(1, 1),
        padding=((1, 1), (1, 1)),
        dimension_numbers=("NCHW", "OIHW", "NCHW"),
    )
    out = out + bias[None, :, None, None]
    return jnp.maximum(out, 0.0)


if __name__ == "__main__":
    key = jax.random.PRNGKey(0)
    kx, kw, kb = jax.random.split(key, 3)

    N, C, H, W = 2, 4, 16, 16
    x = jax.random.normal(kx, (N, C, H, W), dtype=jnp.float32)
    # Deterministic parameter init (shapes match nn.Conv2d(C, C, 3, padding=1)).
    fan_in = C * KER * KER
    bound = 1.0 / (fan_in ** 0.5)
    w = jax.random.uniform(kw, (C, C, KER, KER), jnp.float32, -bound, bound)
    b = jax.random.uniform(kb, (C,), jnp.float32, -bound, bound)

    out = step_layer_forward(x, w, b)
    jax.block_until_ready(out)

    ref = _reference_forward(x, w, b)
    assert out.shape == (N, C, H, W)
    assert jnp.allclose(out, ref, atol=1e-5, rtol=1e-5), "mismatch vs reference conv"

    print("KERNEL_OK")
</pallas_src>

<mosaic_0001>
module attributes {stable_mosaic.version = 11 : i64} {
  func.func @conv3x3_relu_kernel(%arg0: i32, %arg1: memref<1x4x256xf32, #tpu.memory_space<vmem>>, %arg2: memref<4x36xf32, #tpu.memory_space<vmem>>, %arg3: memref<4x1xf32, #tpu.memory_space<vmem>>, %arg4: memref<1x4x256xf32, #tpu.memory_space<vmem>>) attributes {dimension_semantics = [#tpu.dimension_semantics<parallel>], iteration_bounds = array<i64: 2>, scalar_prefetch = 0 : i64, scratch_operands = 0 : i64, tpu.core_type = #tpu.core_type<tc>, window_params = [{transform_indices = @transform_0, window_bounds = array<i64: 1, 4, 256>}, {pipeline_mode = #tpu.pipeline_mode<synchronous>, transform_indices = @transform_1, window_bounds = array<i64: 4, 36>}, {pipeline_mode = #tpu.pipeline_mode<synchronous>, transform_indices = @transform_2, window_bounds = array<i64: 4, 1>}, {transform_indices = @transform_3, window_bounds = array<i64: 1, 4, 256>}]} {
    %0 = tpu.iota {dimensions = array<i32: 1>} : vector<1x256xi32>
    %c16_i32 = arith.constant 16 : i32
    %c0_i32 = arith.constant 0 : i32
    %1 = arith.cmpi eq, %c16_i32, %c0_i32 : i32
    %c1_i32 = arith.constant 1 : i32
    %2 = arith.select %1, %c1_i32, %c16_i32 : i32
    %3 = vector.broadcast %2 : i32 to vector<1x256xi32>
    %4 = arith.remsi %0, %3 : vector<1x256xi32>
    %c0_i32_0 = arith.constant 0 : i32
    %5 = vector.broadcast %c0_i32_0 : i32 to vector<1x256xi32>
    %6 = arith.cmpi ne, %4, %5 : vector<1x256xi32>
    %c0_i32_1 = arith.constant 0 : i32
    %7 = vector.broadcast %c0_i32_1 : i32 to vector<1x256xi32>
    %8 = arith.cmpi slt, %4, %7 : vector<1x256xi32>
    %c0_i32_2 = arith.constant 0 : i32
    %9 = arith.cmpi slt, %2, %c0_i32_2 : i32
    %10 = vector.broadcast %9 : i1 to vector<1x256xi1>
    %11 = vector.broadcast %10 : vector<1x256xi1> to vector<1x256xi1>
    %12 = arith.xori %8, %11 : vector<1x256xi1>
    %13 = arith.andi %12, %6 : vector<1x256xi1>
    %14 = vector.broadcast %2 : i32 to vector<1x256xi32>
    %15 = arith.addi %4, %14 : vector<1x256xi32>
    %16 = arith.select %13, %15, %4 : vector<1x256xi1>, vector<1x256xi32>
    %c1_i32_3 = arith.constant 1 : i32
    %17 = vector.broadcast %c1_i32_3 : i32 to vector<1x256xi32>
    %18 = arith.cmpi sge, %16, %17 : vector<1x256xi32>
    %c14_i32 = arith.constant 14 : i32
    %19 = vector.broadcast %c14_i32 : i32 to vector<1x256xi32>
    %20 = arith.cmpi sle, %16, %19 : vector<1x256xi32>
    %c0 = arith.constant 0 : index
    %c0_4 = arith.constant 0 : index
    %21 = vector.load %arg2[%c0, %c0_4] : memref<4x36xf32, #tpu.memory_space<vmem>>, vector<4x36xf32>
    %c0_5 = arith.constant 0 : index
    %c0_6 = arith.constant 0 : index
    %22 = vector.load %arg3[%c0_5, %c0_6] : memref<4x1xf32, #tpu.memory_space<vmem>>, vector<4x1xf32>
    %c0_7 = arith.constant 0 : index
    %c0_8 = arith.constant 0 : index
    %c0_9 = arith.constant 0 : index
    %23 = vector.load %arg1[%c0_7, %c0_8, %c0_9] : memref<1x4x256xf32, #tpu.memory_space<vmem>>, vector<1x4x256xf32>
    %24 = vector.shape_cast %23 : vector<1x4x256xf32> to vector<4x256xf32>
    %cst = arith.constant 0.000000e+00 : f32
    %25 = vector.broadcast %cst : f32 to vector<4x17xf32>
    %26 = vector.extract_strided_slice %24 {offsets = [0, 0], sizes = [4, 239], strides = [1, 1]} : vector<4x256xf32> to vector<4x239xf32>
    %27 = tpu.concatenate %25, %26 in 1 : vector<4x17xf32>, vector<4x239xf32> -> vector<4x256xf32>
    %cst_10 = arith.constant 0.000000e+00 : f32
    %28 = vector.shape_cast %18 : vector<1x256xi1> to vector<1x256xi1>
    %29 = vector.broadcast %28 : vector<1x256xi1> to vector<4x256xi1>
    %30 = vector.broadcast %cst_10 : f32 to vector<4x256xf32>
    %31 = arith.select %29, %27, %30 : vector<4x256xi1>, vector<4x256xf32>
    %cst_11 = arith.constant 0.000000e+00 : f32
    %32 = vector.broadcast %cst_11 : f32 to vector<4x16xf32>
    %33 = vector.extract_strided_slice %24 {offsets = [0, 0], sizes = [4, 240], strides = [1, 1]} : vector<4x256xf32> to vector<4x240xf32>
    %34 = tpu.concatenate %32, %33 in 1 : vector<4x16xf32>, vector<4x240xf32> -> vector<4x256xf32>
    %cst_12 = arith.constant 0.000000e+00 : f32
    %35 = vector.broadcast %cst_12 : f32 to vector<4x15xf32>
    %36 = vector.extract_strided_slice %24 {offsets = [0, 0], sizes = [4, 241], strides = [1, 1]} : vector<4x256xf32> to vector<4x241xf32>
    %37 = tpu.concatenate %35, %36 in 1 : vector<4x15xf32>, vector<4x241xf32> -> vector<4x256xf32>
    %cst_13 = arith.constant 0.000000e+00 : f32
    %38 = vector.shape_cast %20 : vector<1x256xi1> to vector<1x256xi1>
    %39 = vector.broadcast %38 : vector<1x256xi1> to vector<4x256xi1>
    %40 = vector.broadcast %cst_13 : f32 to vector<4x256xf32>
    %41 = arith.select %39, %37, %40 : vector<4x256xi1>, vector<4x256xf32>
    %cst_14 = arith.constant 0.000000e+00 : f32
    %42 = vector.broadcast %cst_14 : f32 to vector<4x1xf32>
    %43 = vector.extract_strided_slice %24 {offsets = [0, 0], sizes = [4, 255], strides = [1, 1]} : vector<4x256xf32> to vector<4x255xf32>
    %44 = tpu.concatenate %42, %43 in 1 : vector<4x1xf32>, vector<4x255xf32> -> vector<4x256xf32>
    %cst_15 = arith.constant 0.000000e+00 : f32
    %45 = vector.shape_cast %18 : vector<1x256xi1> to vector<1x256xi1>
    %46 = vector.broadcast %45 : vector<1x256xi1> to vector<4x256xi1>
    %47 = vector.broadcast %cst_15 : f32 to vector<4x256xf32>
    %48 = arith.select %46, %44, %47 : vector<4x256xi1>, vector<4x256xf32>
    %cst_16 = arith.constant 0.000000e+00 : f32
    %49 = vector.broadcast %cst_16 : f32 to vector<4x1xf32>
    %50 = vector.extract_strided_slice %24 {offsets = [0, 1], sizes = [4, 255], strides = [1, 1]} : vector<4x256xf32> to vector<4x255xf32>
    %51 = tpu.concatenate %50, %49 in 1 : vector<4x255xf32>, vector<4x1xf32> -> vector<4x256xf32>
    %cst_17 = arith.constant 0.000000e+00 : f32
    %52 = vector.shape_cast %20 : vector<1x256xi1> to vector<1x256xi1>
    %53 = vector.broadcast %52 : vector<1x256xi1> to vector<4x256xi1>
    %54 = vector.broadcast %cst_17 : f32 to vector<4x256xf32>
    %55 = arith.select %53, %51, %54 : vector<4x256xi1>, vector<4x256xf32>
    %cst_18 = arith.constant 0.000000e+00 : f32
    %56 = vector.broadcast %cst_18 : f32 to vector<4x15xf32>
    %57 = vector.extract_strided_slice %24 {offsets = [0, 15], sizes = [4, 241], strides = [1, 1]} : vector<4x256xf32> to vector<4x241xf32>
    %58 = tpu.concatenate %57, %56 in 1 : vector<4x241xf32>, vector<4x15xf32> -> vector<4x256xf32>
    %cst_19 = arith.constant 0.000000e+00 : f32
    %59 = vector.shape_cast %18 : vector<1x256xi1> to vector<1x256xi1>
    %60 = vector.broadcast %59 : vector<1x256xi1> to vector<4x256xi1>
    %61 = vector.broadcast %cst_19 : f32 to vector<4x256xf32>
    %62 = arith.select %60, %58, %61 : vector<4x256xi1>, vector<4x256xf32>
    %cst_20 = arith.constant 0.000000e+00 : f32
    %63 = vector.broadcast %cst_20 : f32 to vector<4x16xf32>
    %64 = vector.extract_strided_slice %24 {offsets = [0, 16], sizes = [4, 240], strides = [1, 1]} : vector<4x256xf32> to vector<4x240xf32>
    %65 = tpu.concatenate %64, %63 in 1 : vector<4x240xf32>, vector<4x16xf32> -> vector<4x256xf32>
    %cst_21 = arith.constant 0.000000e+00 : f32
    %66 = vector.broadcast %cst_21 : f32 to vector<4x17xf32>
    %67 = vector.extract_strided_slice %24 {offsets = [0, 17], sizes = [4, 239], strides = [1, 1]} : vector<4x256xf32> to vector<4x239xf32>
    %68 = tpu.concatenate %67, %66 in 1 : vector<4x239xf32>, vector<4x17xf32> -> vector<4x256xf32>
    %cst_22 = arith.constant 0.000000e+00 : f32
    %69 = vector.shape_cast %20 : vector<1x256xi1> to vector<1x256xi1>
    %70 = vector.broadcast %69 : vector<1x256xi1> to vector<4x256xi1>
    %71 = vector.broadcast %cst_22 : f32 to vector<4x256xf32>
    %72 = arith.select %70, %68, %71 : vector<4x256xi1>, vector<4x256xf32>
    %73 = tpu.concatenate %31, %34, %41, %48, %24, %55, %62, %65, %72 in 0 : vector<4x256xf32>, vector<4x256xf32>, vector<4x256xf32>, vector<4x256xf32>, vector<4x256xf32>, vector<4x256xf32>, vector<4x256xf32>, vector<4x256xf32>, vector<4x256xf32> -> vector<36x256xf32>
    %cst_23 = arith.constant dense<0.000000e+00> : vector<4x256xf32>
    %74 = tpu.matmul %21, %73, %cst_23 {dimension_numbers = #tpu.dot_dimension_numbers<[1], [0], [0], [1], [0, 0, 1, 1], [], []>} : vector<4x36xf32>, vector<36x256xf32>, vector<4x256xf32> -> vector<4x256xf32>
    %75 = vector.broadcast %22 : vector<4x1xf32> to vector<4x256xf32>
    %76 = arith.addf %74, %75 : vector<4x256xf32>
    %cst_24 = arith.constant 0.000000e+00 : f32
    %77 = vector.broadcast %cst_24 : f32 to vector<4x256xf32>
    %78 = arith.maximumf %76, %77 : vector<4x256xf32>
    %c0_25 = arith.constant 0 : index
    %c0_26 = arith.constant 0 : index
    %c0_27 = arith.constant 0 : index
    %79 = vector.load %arg4[%c0_25, %c0_26, %c0_27] : memref<1x4x256xf32, #tpu.memory_space<vmem>>, vector<1x4x256xf32>
    %80 = vector.shape_cast %79 : vector<1x4x256xf32> to vector<4x256xf32>
    %81 = vector.shape_cast %78 : vector<4x256xf32> to vector<1x4x256xf32>
    tpu.vector_store %arg4[%c0_25, %c0_26, %c0_27], %81 {strides = array<i32>} : memref<1x4x256xf32, #tpu.memory_space<vmem>>, vector<1x4x256xf32>,
    return
  }
  func.func @transform_0(%arg0: i32) -> (i32, i32, i32) {
    %c0_i32 = arith.constant 0 : i32
    %c0_i32_0 = arith.constant 0 : i32
    %c0_i32_1 = arith.constant 0 : i32
    return %arg0, %c0_i32, %c0_i32_0 : i32, i32, i32
  }
  func.func @transform_1(%arg0: i32) -> (i32, i32) {
    %c0_i32 = arith.constant 0 : i32
    %c0_i32_0 = arith.constant 0 : i32
    %c0_i32_1 = arith.constant 0 : i32
    return %c0_i32, %c0_i32_0 : i32, i32
  }
  func.func @transform_2(%arg0: i32) -> (i32, i32) {
    %c0_i32 = arith.constant 0 : i32
    %c0_i32_0 = arith.constant 0 : i32
    %c0_i32_1 = arith.constant 0 : i32
    return %c0_i32, %c0_i32_0 : i32, i32
  }
  func.func @transform_3(%arg0: i32) -> (i32, i32, i32) {
    %c0_i32 = arith.constant 0 : i32
    %c0_i32_0 = arith.constant 0 : i32
    %c0_i32_1 = arith.constant 0 : i32
    return %arg0, %c0_i32, %c0_i32_0 : i32, i32, i32
  }
}

</mosaic_0001>

<llo_original>
// kernel: tpu_custom_call.1
$region0: #{tpu_custom_call.1}
  #allocation0 [shape = 'u32[]', space=smem, size = 0x4, offset = 0x4, fixed_abs, tag = 'smem constant byte address 0x4 - core index']
  #allocation1 [shape = 'u32[144,128]{1,0:T(1,128)}', space=vmem, size = 0x12000, scoped, tag = 'internal scratch']
  %s0 = inlined_call_operand.hbm [shape: f32[2,4,256], index: 0, kind: input, shape index: {}]
  %s1 = inlined_call_operand.vmem [shape: f32[4,36], index: 1, kind: input, shape index: {}]
  %s2 = inlined_call_operand.vmem [shape: f32[4,1], index: 2, kind: input, shape index: {}]
  %s3 = inlined_call_operand.hbm [shape: f32[2,4,256], index: 3, kind: output, shape index: {}]
  %s4 = sld [smem:[#allocation0]]
  $region49: #{tpu_custom_call.1} parent=0
    _
  %s6 = ssub.s32 1, %s4
  %s7 = scalar_select 0, %s6, %s4
  $region1: #{tpu_custom_call.1} parent=0
    #allocation2 [shape = 'u8[8192]{0}', space=vmem, size = 0x2000, scoped, tag = 'input window, operand 0']
    #allocation3 [shape = 's32[2]{0}', space=sflag, size = 0x8, scoped, tag = 'scoped memory for tpu_custom_call.1']
    #allocation4 [shape = 's32[2]{0}', space=sflag, size = 0x8, scoped, tag = 'scoped memory for tpu_custom_call.1']
    #allocation5 [shape = 'u8[8192]{0}', space=vmem, size = 0x2000, scoped, tag = 'output window, operand 0']
    %8 = vsyncpa [#allocation3], 0
    %s9 = scalar_lea.sflag [#allocation3], 1
    %10 = vsyncpa %s9, 0
    %11 = vsyncpa [#allocation4], 0
    %s12 = scalar_lea.sflag [#allocation4], 1
    %13 = vsyncpa %s12, 0
    loop: start=0, step=1, limit=4
    $region2: #{tpu_custom_call.1} parent=1 // loop_pre_header
      _
    $region3: #{tpu_custom_call.1} parent=1 // loop_header
      %s15 = sphi 0, %s19
      %p16 = scmp.ge.s32.totalorder %s15, 4
      %s25 = sphi 0, %s27
      %s28 = sphi 0, %s25
      %s29 = sphi 0, %s28
      %s45 = sphi 0, %s29
      %s49 = sphi 0, %s49
      %s51 = sphi 0, %s49
      %s52 = sphi 0, %s51
      %s66 = sphi 0, %s52
      %s70 = sphi 0, %s70
      %s72 = sphi 0, %s70
      %s73 = sphi 0, %s72
      %s87 = sphi 0, %s73
      %s93 = sphi 0, %s95
      %s96 = sphi 0, %s93
      %s97 = sphi 0, %s96
      %s113 = sphi 0, %s97
    $region4: #{tpu_custom_call.1} parent=1 // loop_header_branch
      %18 = sbr.rel (%p16) target = $region8
    $region5: #{tpu_custom_call.1} parent=1 // loop_body
      %s20 = ssub.s32 %s15, 1
      %s21 = ssub.s32 %s15, 2
      %s22 = sadd.s32 %s15, 1
      %s23 = ssub.s32 %s15, %s22
      %p24 = scmp.eq.s32.totalorder %s23, 0
      %s26 = sadd.s32 %s25, 1
      %s27 = scalar_select %p24, %s25, %s26
      %p30 = pneg %p24
      %p31 = scmp.eq.s32.totalorder %s15, 1
      %p32 = por %p30, %p31
      %p33 = scmp.ne.s32.totalorder %s25, %s28
      %p34 = scmp.eq.s32.totalorder %s15, 0
      %p35 = por %p33, %p34
      %p36 = scmp.ne.s32.totalorder %s25, %s28
      %p37 = scmp.eq.s32.totalorder %s20, 1
      %p38 = por %p36, %p37
      %p39 = scmp.ne.s32.totalorder %s28, %s29
      %p40 = scmp.eq.s32.totalorder %s20, 0
      %p41 = por %p39, %p40
      %p42 = scmp.ne.s32.totalorder %s28, %s29
      %p43 = scmp.eq.s32.totalorder %s21, 1
      %p44 = por %p42, %p43
      %p46 = scmp.ne.s32.totalorder %s29, %s45
      %p47 = scmp.eq.s32.totalorder %s21, 0
      %p48 = por %p46, %p47
      %s50 = sadd.s32 %s49, 1
      %p53 = scmp.eq.s32.totalorder %s15, 1
      %p54 = scmp.ne.s32.totalorder %s49, %s51
      %p55 = scmp.eq.s32.totalorder %s15, 0
      %p56 = por %p54, %p55
      %p57 = scmp.ne.s32.totalorder %s49, %s51
      %p58 = scmp.eq.s32.totalorder %s20, 1
      %p59 = por %p57, %p58
      %p60 = scmp.ne.s32.totalorder %s51, %s52
      %p61 = scmp.eq.s32.totalorder %s20, 0
      %p62 = por %p60, %p61
      %p63 = scmp.ne.s32.totalorder %s51, %s52
      %p64 = scmp.eq.s32.totalorder %s21, 1
      %p65 = por %p63, %p64
      %p67 = scmp.ne.s32.totalorder %s52, %s66
      %p68 = scmp.eq.s32.totalorder %s21, 0
      %p69 = por %p67, %p68
      %s71 = sadd.s32 %s70, 1
      %p74 = scmp.eq.s32.totalorder %s15, 1
      %p75 = scmp.ne.s32.totalorder %s70, %s72
      %p76 = scmp.eq.s32.totalorder %s15, 0
      %p77 = por %p75, %p76
      %p78 = scmp.ne.s32.totalorder %s70, %s72
      %p79 = scmp.eq.s32.totalorder %s20, 1
      %p80 = por %p78, %p79
      %p81 = scmp.ne.s32.totalorder %s72, %s73
      %p82 = scmp.eq.s32.totalorder %s20, 0
      %p83 = por %p81, %p82
      %p84 = scmp.ne.s32.totalorder %s72, %s73
      %p85 = scmp.eq.s32.totalorder %s21, 1
      %p86 = por %p84, %p85
      %p88 = scmp.ne.s32.totalorder %s73, %s87
      %p89 = scmp.eq.s32.totalorder %s21, 0
      %p90 = por %p88, %p89
      %s91 = ssub.s32 %s15, %s22
      %p92 = scmp.eq.s32.totalorder %s91, 0
      %s94 = sadd.s32 %s93, 1
      %s95 = scalar_select %p92, %s93, %s94
      %p98 = pneg %p92
      %p99 = scmp.eq.s32.totalorder %s15, 1
      %p100 = por %p98, %p99
      %p101 = scmp.ne.s32.totalorder %s93, %s96
      %p102 = scmp.eq.s32.totalorder %s15, 0
      %p103 = por %p101, %p102
      %p104 = scmp.ne.s32.totalorder %s93, %s96
      %p105 = scmp.eq.s32.totalorder %s20, 1
      %p106 = por %p104, %p105
      %p107 = scmp.ne.s32.totalorder %s96, %s97
      %p108 = scmp.eq.s32.totalorder %s20, 0
      %p109 = por %p107, %p108
      %p110 = scmp.ne.s32.totalorder %s96, %s97
      %p111 = scmp.eq.s32.totalorder %s21, 1
      %p112 = por %p110, %p111
      %p114 = scmp.ne.s32.totalorder %s97, %s113
      %p115 = scmp.eq.s32.totalorder %s21, 0
      %p116 = por %p114, %p115
      %p117 = scmp.le.s32.totalorder 1, %s15
      %p118 = scmp.lt.s32.totalorder %s15, 3
      %p119 = pnand %p117, %p118
      %p120 = pneg %p119
      // Predicated region
      $region9: #{tpu_custom_call.1} parent=5 // pred_check
        _
      $region10: #{tpu_custom_call.1} parent=5 // pred_check_branch
        %122 = sbr.rel (%p119) target = $region12
      $region11: #{tpu_custom_call.1} parent=5 // pred_region
        %s123 = ssub.s32 %s15, 1
        // Predicated region
        $region13: #{tpu_custom_call.1} parent=11 // pred_check
          %p124 = pneg %p62
        $region14: #{tpu_custom_call.1} parent=11 // pred_check_branch
          %126 = sbr.rel (%p124) target = $region16
        $region15: #{tpu_custom_call.1} parent=11 // pred_region
          _
        $region16: #{tpu_custom_call.1} parent=11 // pred_fallthru
          _
        // Predicated region
        $region17: #{tpu_custom_call.1} parent=11 // pred_check
          %p127 = pneg %p83
        $region18: #{tpu_custom_call.1} parent=11 // pred_check_branch
          %129 = sbr.rel (%p127) target = $region20
        $region19: #{tpu_custom_call.1} parent=11 // pred_region
          _
        $region20: #{tpu_custom_call.1} parent=11 // pred_fallthru
          _
      $region12: #{tpu_custom_call.1} parent=5 // pred_fallthru
        _
      %p130 = scmp.lt.s32.totalorder %s15, 2
      // Predicated region
      $region21: #{tpu_custom_call.1} parent=5 // pred_check
        %p131 = pneg %p130
      $region22: #{tpu_custom_call.1} parent=5 // pred_check_branch
        %133 = sbr.rel (%p131) target = $region24
      $region23: #{tpu_custom_call.1} parent=5 // pred_region
        // Predicated region
        $region25: #{tpu_custom_call.1} parent=23 // pred_check
          %p134 = pneg %p35
        $region26: #{tpu_custom_call.1} parent=23 // pred_check_branch
          %136 = sbr.rel (%p134) target = $region28
        $region27: #{tpu_custom_call.1} parent=23 // pred_region
          %s137 = sand.u32 %s25, 1
          %s138 = scalar_lea.sflag [#allocation3], %s137
          %s139 = sand.u32 %s25, 1
          %s140 = smul.addr %s139, 8
          %s141 = scalar_lea.vmem [#allocation2], %s140
          %s143 = ssub.s32 128, 128
          %144 = vsyncadd %s138, %s143
          %s145 = smul.addr %s15, 2
          %s146 = smul.addr %s145, 64
          %s147 = scalar_lea.hbm %s0, %s146
          %s149 = sshll.u32 %s141, 4
          %s150 = int_to_ptr.vmem [resolvable:$true] %s149
          %152 = dma.hbm_to_vmem [thread:$0]  %s147, 128, %s150, %s138
        $region28: #{tpu_custom_call.1} parent=23 // pred_fallthru
          _
      $region24: #{tpu_custom_call.1} parent=5 // pred_fallthru
        _
      %p153 = scmp.le.s32.totalorder 1, %s15
      %p154 = scmp.lt.s32.totalorder %s15, 3
      %p155 = pnand %p153, %p154
      %p156 = pneg %p155
      // Predicated region
      $region29: #{tpu_custom_call.1} parent=5 // pred_check
        _
      $region30: #{tpu_custom_call.1} parent=5 // pred_check_branch
        %158 = sbr.rel (%p155) target = $region32
      $region31: #{tpu_custom_call.1} parent=5 // pred_region
        %s159 = ssub.s32 %s15, 1
        %s160 = sand.u32 %s28, 1
        %s161 = scalar_lea.sflag [#allocation3], %s160
        %s162 = sand.u32 %s28, 1
        %s163 = smul.addr %s162, 8
        %s164 = scalar_lea.vmem [#allocation2], %s163
        // Predicated region
        $region33: #{tpu_custom_call.1} parent=31 // pred_check
          %p165 = pneg %p41
        $region34: #{tpu_custom_call.1} parent=31 // pred_check_branch
          %167 = sbr.rel (%p165) target = $region36
        $region35: #{tpu_custom_call.1} parent=31 // pred_region
          %168 = dma.done %s161, 128
        $region36: #{tpu_custom_call.1} parent=31 // pred_fallthru
          _
        %s169 = sand.u32 %s28, 1
        %s170 = scalar_lea.sflag [#allocation3], %s169
        %s171 = sand.u32 %s28, 1
        %s172 = smul.addr %s171, 8
        %s173 = scalar_lea.vmem [#allocation2], %s172
        %p174 = pneg %p41
        %p175 = pneg %p38
        %p176 = pneg %p62
        %p177 = pneg %p59
        %p178 = pneg %p83
        %p179 = pneg %p80
        %p180 = pneg %p109
        %p181 = pneg %p106
        %s182 = sand.u32 %s96, 1
        %s183 = scalar_lea.sflag [#allocation4], %s182
        %s184 = sand.u32 %s96, 1
        %s185 = smul.addr %s184, 8
        %s186 = scalar_lea.vmem [#allocation5], %s185
        %v187 = vlaneseq
        %v188 = vand.u32 %v187, 127
        %v189 = vadd.s32 %v188, 128
        %vm190 = vcmp.lt.s32.totalorder %v188, 0
        %v191 = vsub.s32 0, %v188
        %v192 = vsel %vm190, %v191, %v188
        %v193 = vshrl.u32 %v192, 4
        %v194 = vand.u32 %v192, 15
        %v195 = vsub.s32 0, %v194
        %v196 = vsel %vm190, %v195, %v194
        %vm197 = vcmp.lt.s32.totalorder %v189, 0
        %v198 = vsub.s32 0, %v189
        %v199 = vsel %vm197, %v198, %v189
        %v200 = vshrl.u32 %v199, 4
        %v201 = vand.u32 %v199, 15
        %v202 = vsub.s32 0, %v201
        %v203 = vsel %vm197, %v202, %v201
        %vm204 = vcmp.ne.s32.totalorder %v196, 0
        %vm205 = vcmp.ne.s32.totalorder %v203, 0
        %vm206 = vcmp.lt.s32.totalorder %v196, 0
        %vm207 = vcmp.lt.s32.totalorder %v203, 0
        %vm208 = vmand %vm206, %vm204
        %vm209 = vmand %vm207, %vm205
        %v210 = vadd.s32 %v196, 16
        %v211 = vadd.s32 %v203, 16
        %v212 = vsel %vm208, %v210, %v196
        %v213 = vsel %vm209, %v211, %v203
        %vm214 = vcmp.ge.s32.totalorder %v212, 1
        %vm215 = vcmp.ge.s32.totalorder %v213, 1
        %vm216 = vcmp.le.s32.totalorder %v212, 14
        %vm217 = vcmp.le.s32.totalorder %v213, 14
        %v218 = vld [vmem:[%s1] sm:$0xf]
        %v219 = vld [vmem:[%s2] sm:$0xf]
        %v220 = vld [vmem:[%s164] sm:$0xff]
        %v222 = vcombine.high %v220, %v220
        %223 = vrot.lane.b32.xlu0 %v220, 17
        %v224 = vpop.permute.xlu0 %223
        %225 = vrot.lane.b32.xlu0 %v222, 17
        %v226 = vpop.permute.xlu0 %225
        %vm227 = vcmask 138240
        %v228 = vsel %vm227, %v224, %v226
        %v231 = vsel %vm227, 0.0, %v224
        %v232 = vsel %vm214, 1, 0
        %v233 = vsel %vm215, 1, 0
        %vm234 = vcmp.eq.s32.totalorder %v232, 1
        %vm235 = vcmp.eq.s32.totalorder %v233, 1
        %v236 = vsel %vm234, %v231, 0.0
        %v237 = vsel %vm235, %v228, 0.0
        %238 = vrot.lane.b32.xlu0 %v220, 16
        %v239 = vpop.permute.xlu0 %238
        %240 = vrot.lane.b32.xlu0 %v222, 16
        %v241 = vpop.permute.xlu0 %240
        %vm242 = vcmask 130048
        %v243 = vsel %vm242, %v239, %v241
        %v245 = vsel %vm242, 0.0, %v239
        %246 = vrot.lane.b32.xlu0 %v220, 15
        %v247 = vpop.permute.xlu0 %246
        %248 = vrot.lane.b32.xlu0 %v222, 15
        %v249 = vpop.permute.xlu0 %248
        %vm250 = vcmask 121856
        %v251 = vsel %vm250, %v247, %v249
        %v254 = vsel %vm250, 0.0, %v247
        %v255 = vsel %vm216, 1, 0
        %v256 = vsel %vm217, 1, 0
        %vm257 = vcmp.eq.s32.totalorder %v255, 1
        %vm258 = vcmp.eq.s32.totalorder %v256, 1
        %v259 = vsel %vm257, %v254, 0.0
        %v260 = vsel %vm258, %v251, 0.0
        %261 = vrot.lane.b32.xlu0 %v220, 1
        %v262 = vpop.permute.xlu0 %261
        %263 = vrot.lane.b32.xlu0 %v222, 1
        %v264 = vpop.permute.xlu0 %263
        %vm265 = vcmask 7168
        %v266 = vsel %vm265, %v262, %v264
        %v269 = vsel %vm265, 0.0, %v262
        %v270 = vsel %vm234, %v269, 0.0
        %v271 = vsel %vm235, %v266, 0.0
        %272 = vrot.lane.b32.xlu0 %v220, 127
        %v273 = vpop.permute.xlu0 %272
        %274 = vrot.lane.b32.xlu0 %v222, 127
        %v275 = vpop.permute.xlu0 %274
        %vm276 = vcmask 1039360
        %v277 = vsel %vm276, %v273, %v275
        %v280 = vsel %vm276, %v275, 0.0
        %v281 = vsel %vm257, %v277, 0.0
        %v282 = vsel %vm258, %v280, 0.0
        %283 = vrot.lane.b32.xlu0 %v220, 113
        %v284 = vpop.permute.xlu0 %283
        %285 = vrot.lane.b32.xlu0 %v222, 113
        %v286 = vpop.permute.xlu0 %285
        %vm287 = vcmask 924672
        %v288 = vsel %vm287, %v284, %v286
        %v291 = vsel %vm287, %v286, 0.0
        %v292 = vsel %vm234, %v288, 0.0
        %v293 = vsel %vm235, %v291, 0.0
        %294 = vrot.lane.b32.xlu0 %v220, 112
        %v295 = vpop.permute.xlu0 %294
        %296 = vrot.lane.b32.xlu0 %v222, 112
        %v297 = vpop.permute.xlu0 %296
        %vm298 = vcmask 916480
        %v299 = vsel %vm298, %v295, %v297
        %v301 = vsel %vm298, %v297, 0.0
        %302 = vrot.lane.b32.xlu0 %v220, 111
        %v303 = vpop.permute.xlu0 %302
        %304 = vrot.lane.b32.xlu0 %v222, 111
        %v305 = vpop.permute.xlu0 %304
        %vm306 = vcmask 908288
        %v307 = vsel %vm306, %v303, %v305
        %v310 = vsel %vm306, %v305, 0.0
        %v311 = vsel %vm257, %v307, 0.0
        %v312 = vsel %vm258, %v310, 0.0
        %v314 = vrot.slane %v245, 4
        %v315 = vrot.slane %v243, 4
        %v320 = vrot.slane %v270, 4
        %v321 = vrot.slane %v271, 4
        %v327 = vrot.slane %v281, 4
        %v328 = vrot.slane %v282, 4
        %v332 = vrot.slane %v299, 4
        %v333 = vrot.slane %v301, 4
        %vm336 = vcmask 1043456
        %v337 = vsel %vm336, %v236, %v314
        %v338 = vsel %vm336, %v237, %v315
        %v339 = vsel %vm336, %v259, %v320
        %v340 = vsel %vm336, %v260, %v321
        %v341 = vsel %vm336, %v220, %v327
        %v342 = vsel %vm336, %v222, %v328
        %v343 = vsel %vm336, %v292, %v332
        %v344 = vsel %vm336, %v293, %v333
        %346 = vset.pattern.permute.xlu0 0
        %347 = vperm.xlu0 %346, %v219
        %v348 = vpop.permute.xlu0 %347
        %vm350 = vcmask 293888
        %v352 = vsel %vm350, %v218, 0
        %v355 = vsel %vm336, %v311, 0
        %v358 = vsel %vm336, %v312, 0
        %360 = vmatprep.subr.mxu0 %v338
        %361 = vmatpush1.msra.mxu0 %v337
        %362 = vmatprep.subr.mxu0 %v340
        %363 = vmatpush1.msra.mxu0 %v339
        %364 = vmatprep.subr.mxu0 %v342
        %365 = vmatpush1.msra.mxu0 %v341
        %366 = vmatprep.subr.mxu0 %v344
        %367 = vmatpush1.msra.mxu0 %v343
        %368 = vmatprep.subr.mxu0 %v358
        %369 = vmatpush1.msra.mxu0 %v355
        %370 = vmatprep.subr.mxu0 0.0
        %371 = vmatpush1.msra.mxu0 0.0
        %372 = vmatprep.subr.mxu0 0.0
        %373 = vmatpush1.msra.mxu0 0.0
        %374 = vmatprep.subr.mxu0 0.0
        %375 = vmatpush1.msra.mxu0 0.0
        %376 = vmatprep.subr.mxu0 0.0
        %377 = vmatpush1.msra.mxu0 0.0
        %378 = vmatprep.subr.mxu0 0.0
        %379 = vmatpush1.msra.mxu0 0.0
        %380 = vmatprep.subr.mxu0 0.0
        %381 = vmatpush1.msra.mxu0 0.0
        %382 = vmatprep.subr.mxu0 0.0
        %383 = vmatpush1.msra.mxu0 0.0
        %384 = vmatprep.subr.mxu0 0.0
        %385 = vmatpush1.msra.mxu0 0.0
        %386 = vmatprep.subr.mxu0 0.0
        %387 = vmatpush1.msra.mxu0 0.0
        %388 = vmatprep.subr.mxu0 0.0
        %389 = vmatpush1.msra.mxu0 0.0
        %390 = vmatprep.subr.mxu0 0.0
        %391 = vmatpush1.msra.mxu0 0.0
        %392 = vmatprep.subr.mxu0 0.0
        %393 = vmatpush1.msra.mxu0 0.0
        %394 = vmatprep.subr.mxu0 0.0
        %395 = vmatpush1.msra.mxu0 0.0
        %396 = vmatprep.subr.mxu0 0.0
        %397 = vmatpush1.msra.mxu0 0.0
        %398 = vmatprep.subr.mxu0 0.0
        %399 = vmatpush1.msra.mxu0 0.0
        %400 = vmatprep.subr.mxu0 0.0
        %401 = vmatpush1.msra.mxu0 0.0
        %402 = vmatprep.subr.mxu0 0.0
        %403 = vmatpush1.msra.mxu0 0.0
        %404 = vmatprep.subr.mxu0 0.0
        %405 = vmatpush1.msra.mxu0 0.0
        %406 = vmatprep.subr.mxu0 0.0
        %407 = vmatpush1.msra.mxu0 0.0
        %408 = vmatprep.subr.mxu0 0.0
        %409 = vmatpush1.msra.mxu0 0.0
        %410 = vmatprep.subr.mxu0 0.0
        %411 = vmatpush1.msra.mxu0 0.0
        %412 = vmatprep.subr.mxu0 0.0
        %413 = vmatpush1.msra.mxu0 0.0
        %414 = vmatprep.subr.mxu0 0.0
        %415 = vmatpush1.msra.mxu0 0.0
        %416 = vmatprep.subr.mxu0 0.0
        %417 = vmatpush1.msra.mxu0 0.0
        %418 = vmatprep.subr.mxu0 0.0
        %419 = vmatpush1.msra.mxu0 0.0
        %420 = vmatprep.subr.mxu0 0.0
        %421 = vmatpush1.msra.mxu0 0.0
        %422 = vmatprep.subr.mxu0 0.0
        %423 = vmatpush1.msra.mxu0 0.0
        %424 = vmatprep.mubr.f32.mxu0 0.0
        %425 = vmatmul.mubr.f32.gmra.mrb[0].mxu0 %v352
        %v426 = vpop.f32.mrb[0].mxu0
        %v427 = vadd.f32 %v348, %v426
        %v428 = vpop.f32.mrb[0].mxu0
        %v429 = vadd.f32 %v348, %v428
        %430 = vdwg.mxu0
        %v431 = vmax.f32 %v427, 0.0
        %v432 = vmax.f32 %v429, 0.0
        %v435 = vcombine.low %v431, %v432
        %437 = vst [vmem:[%s186] sm:$0xff] %v435
        %s438 = sand.u32 %s96, 1
        %s439 = scalar_lea.sflag [#allocation4], %s438
        %s440 = sand.u32 %s96, 1
        %s441 = smul.addr %s440, 8
        %s442 = scalar_lea.vmem [#allocation5], %s441
        // Predicated region
        $region37: #{tpu_custom_call.1} parent=31 // pred_check
          %p443 = pneg %p106
        $region38: #{tpu_custom_call.1} parent=31 // pred_check_branch
          %445 = sbr.rel (%p443) target = $region40
        $region39: #{tpu_custom_call.1} parent=31 // pred_region
          %s447 = ssub.s32 128, 128
          %448 = vsyncadd %s439, %s447
          %s449 = smul.addr %s20, 2
          %s450 = smul.addr %s449, 64
          %s451 = scalar_lea.hbm %s3, %s450
          %s453 = sshll.u32 %s442, 4
          %s454 = int_to_ptr.vmem [resolvable:$true] %s453
          %456 = dma.vmem_to_hbm [thread:$0]  %s454, 128, %s451, %s439
        $region40: #{tpu_custom_call.1} parent=31 // pred_fallthru
          _
      $region32: #{tpu_custom_call.1} parent=5 // pred_fallthru
        _
      %p457 = scmp.le.s32.totalorder 2, %s15
      // Predicated region
      $region41: #{tpu_custom_call.1} parent=5 // pred_check
        %p458 = pneg %p457
      $region42: #{tpu_custom_call.1} parent=5 // pred_check_branch
        %460 = sbr.rel (%p458) target = $region44
      $region43: #{tpu_custom_call.1} parent=5 // pred_region
        %s461 = ssub.s32 %s15, 2
        // Predicated region
        $region45: #{tpu_custom_call.1} parent=43 // pred_check
          %p462 = pneg %p112
        $region46: #{tpu_custom_call.1} parent=43 // pred_check_branch
          %464 = sbr.rel (%p462) target = $region48
        $region47: #{tpu_custom_call.1} parent=43 // pred_region
          %s465 = sand.u32 %s97, 1
          %s466 = scalar_lea.sflag [#allocation4], %s465
          %s467 = sand.u32 %s97, 1
          %s468 = smul.addr %s467, 8
          %s469 = scalar_lea.vmem [#allocation5], %s468
          %470 = dma.done %s466, 128
        $region48: #{tpu_custom_call.1} parent=43 // pred_fallthru
          _
      $region44: #{tpu_custom_call.1} parent=5 // pred_fallthru
        _
    $region6: #{tpu_custom_call.1} parent=1 // loop_footer
      %s19 = sadd.s32 1, %s15
    $region7: #{tpu_custom_call.1} parent=1 // loop_footer_branch
      %14 = sbr.rel target = $region3
    $region8: #{tpu_custom_call.1} parent=1 // loop_exit
      _
    %471 = vsyncpa [#allocation3], 1
    %s472 = scalar_lea.sflag [#allocation3], 1
    %473 = vsyncpa %s472, 1
    %474 = vsyncpa [#allocation4], 1
    %s475 = scalar_lea.sflag [#allocation4], 1
    %476 = vsyncpa %s475, 1

</llo_original>
